<compile_context>
chip_gen: v7x
topology: tpu7x:2x2x1
jax: 0.10.0
libtpu: 0.0.40
codegen_flags: <defaults>
</compile_context>

<pallas_src>
import functools

import jax
import jax.numpy as jnp
import numpy as np
from jax.experimental import pallas as pl
from jax.experimental.pallas import tpu as pltpu

# Module hyperparameters (TAE_decoder defaults)
N_HIDDEN = 64          # ConvTranspose1d in/out channels
POOLING = 8            # Upsample target length == temporal crop length
KERNEL = 10            # ConvTranspose1d kernel size
PAD = POOLING // 2     # ConvTranspose1d padding (= 4)


# --------------------------------------------------------------------------- #
# Init-time weight folding (run ONCE per weight, outside the hot path)
# --------------------------------------------------------------------------- #
def fold_decoder_params(weight, bias, l_in):
    """Fold nearest-upsample + ConvTranspose1d taps + temporal crop + torch's
    .view(B, -1) flatten into one dense matmul:
        W_eff : (C_in*l_in, C_out*POOLING)   row = c_in*l_in + s_in
        b_eff : (1, C_out*POOLING)           col = c_out*POOLING + t
    The row layout matches `features.reshape(B, C*l_in)`, so the forward needs
    NO transpose.  Pure host-side numpy; call at init and reuse."""
    w = np.asarray(weight, np.float32)                    # (C_in, C_out, K)
    b = np.asarray(bias, np.float32)                      # (C_out,)
    c_in, c_out, k_sz = w.shape
    # PyTorch 'nearest' upsample: src = floor(j * l_in / POOLING)
    up_idx = [(j * l_in) // POOLING for j in range(POOLING)]
    # T[s_in, t, k] = 1 iff output time t draws tap k from upsampled position
    # s_up = t + PAD - k (within [0, POOLING)), and that position reads raw
    # input time s_in.
    T = np.zeros((l_in, POOLING, k_sz), np.float32)
    for t in range(POOLING):
        for k in range(k_sz):
            s_up = t + PAD - k
            if 0 <= s_up < POOLING:
                T[up_idx[s_up], t, k] += 1.0
    # W_eff[(c_in, s_in), (c_out, t)] = sum_k T[s_in,t,k] * W[c_in,c_out,k]
    w_eff = np.einsum("stk,iok->isot", T, w).reshape(c_in * l_in, c_out * POOLING)
    b_eff = np.repeat(b, POOLING).reshape(1, c_out * POOLING)
    return jnp.asarray(w_eff), jnp.asarray(b_eff)


# --------------------------------------------------------------------------- #
# Kernel: one MXU matmul + f32 bias add per batch tile
# --------------------------------------------------------------------------- #
def _tae_decoder_kernel(x_ref, w_ref, b_ref, o_ref):
    # x_ref : (Bt, C*L_in)        flattened input tile (c_in*L_in + s_in order)
    # w_ref : (C*L_in, C*POOLING) folded weight (resident across grid steps)
    # b_ref : (1, C*POOLING)      folded bias, f32
    # o_ref : (Bt, C*POOLING)     == torch out.view(B, -1) rows
    acc = jnp.dot(x_ref[...], w_ref[...], preferred_element_type=jnp.float32)
    o_ref[...] = (acc + b_ref[...]).astype(o_ref.dtype)


def _round_up(x, m):
    return ((x + m - 1) // m) * m


@functools.partial(jax.jit, static_argnames=("compute_dtype",))
def tae_decoder_forward(features, w_eff, b_eff, compute_dtype=jnp.float32):
    """features : (B, n_hidden, L_in)   (PyTorch NCL layout)
       w_eff    : (n_hidden*L_in, n_hidden*POOLING)  from fold_decoder_params
       b_eff    : (1, n_hidden*POOLING)
       returns  : (B, n_hidden*POOLING) f32, matching torch out.view(B, -1)."""
    B, C, L = features.shape
    k_in, n_out = w_eff.shape
    assert k_in == C * L and n_out == C * POOLING, (features.shape, w_eff.shape)

    # Zero-cost flatten: row index = c_in*L + s_in matches W_eff's row layout.
    x_flat = features.reshape(B, k_in).astype(compute_dtype)
    w = w_eff.astype(compute_dtype)
    b = b_eff.astype(jnp.float32)          # bias add always f32 (v5e-safe)

    # Batch tiling: sublane-pad; one tile for small B, 256-row tiles for large B.
    bt = min(256, _round_up(B, 8))
    b_pad = _round_up(B, bt)
    if b_pad != B:
        x_flat = jnp.pad(x_flat, ((0, b_pad - B), (0, 0)))
    n_tiles = b_pad // bt

    itemsize = np.dtype(compute_dtype).itemsize
    cost = pl.CostEstimate(
        flops=2 * b_pad * k_in * n_out,
        bytes_accessed=(b_pad * k_in + k_in * n_out) * itemsize + b_pad * n_out * 4,
        transcendentals=0,
    )

    out = pl.pallas_call(
        _tae_decoder_kernel,
        out_shape=jax.ShapeDtypeStruct((b_pad, n_out), jnp.float32),
        grid=(n_tiles,),
        in_specs=[
            pl.BlockSpec((bt, k_in), lambda i: (i, 0)),
            pl.BlockSpec((k_in, n_out), lambda i: (0, 0)),   # weight resident
            pl.BlockSpec((1, n_out), lambda i: (0, 0)),      # bias resident
        ],
        out_specs=pl.BlockSpec((bt, n_out), lambda i: (i, 0)),
        compiler_params=pltpu.CompilerParams(
            dimension_semantics=("parallel",)),              # v7x: 2 TCs split batch
        cost_estimate=cost,
    )(x_flat, w, b)

    return out[:B]


# --------------------------------------------------------------------------- #
# Pure numpy reference of the PyTorch forward (NCL layout)
# --------------------------------------------------------------------------- #
def _reference(features, weight, bias, l_in):
    B, C, _ = features.shape
    up_idx = np.asarray([(j * l_in) // POOLING for j in range(POOLING)])
    up = np.asarray(features, np.float32)[:, :, up_idx]      # (B, C, POOLING)
    w = np.asarray(weight, np.float32)                       # (C_in, C_out, K)
    b = np.asarray(bias, np.float32)
    out = np.zeros((B, C, POOLING), np.float32)
    for t in range(POOLING):
        acc = np.tile(b[None, :], (B, 1))
        for k in range(KERNEL):
            s = t + PAD - k
            if 0 <= s < POOLING:
                acc = acc + up[:, :, s] @ w[:, :, k]
        out[:, :, t] = acc
    return out.reshape(B, C * POOLING)


if __name__ == "__main__":
    L_IN = 4
    BATCH = 2

    key = jax.random.PRNGKey(0)
    k1, k2, k3, k4 = jax.random.split(key, 4)

    features = jax.random.normal(k1, (BATCH, N_HIDDEN, L_IN), jnp.float32)
    # ConvTranspose1d parameters: weight (C_in, C_out, K), bias (C_out,)
    weight = jax.random.normal(k2, (N_HIDDEN, N_HIDDEN, KERNEL), jnp.float32)
    weight = weight / np.sqrt(N_HIDDEN * KERNEL)
    bias = 0.01 * jax.random.normal(k3, (N_HIDDEN,), jnp.float32)

    # Fold once at "init"; the hot path only sees the single matmul kernel.
    w_eff, b_eff = fold_decoder_params(weight, bias, L_IN)

    # --- small batch, f32 path (bit-comparable to the numpy/PyTorch reference)
    ref = _reference(np.asarray(features), np.asarray(weight), np.asarray(bias), L_IN)
    out = jax.block_until_ready(tae_decoder_forward(features, w_eff, b_eff))
    assert out.shape == (BATCH, N_HIDDEN * POOLING), out.shape
    np.testing.assert_allclose(np.asarray(out), ref, rtol=1e-4, atol=1e-4)

    # --- same inputs, bf16 compute path (v6e/v7x DMA/MXU win); f32 accumulation
    out_bf16 = jax.block_until_ready(
        tae_decoder_forward(features, w_eff, b_eff, compute_dtype=jnp.bfloat16))
    np.testing.assert_allclose(np.asarray(out_bf16), ref, rtol=5e-2, atol=5e-2)

    # --- larger batch exercising the multi-tile grid + padding path
    big_b = 300
    features_big = jax.random.normal(k4, (big_b, N_HIDDEN, L_IN), jnp.float32)
    ref_big = _reference(np.asarray(features_big), np.asarray(weight),
                         np.asarray(bias), L_IN)
    out_big = jax.block_until_ready(tae_decoder_forward(features_big, w_eff, b_eff))
    assert out_big.shape == (big_b, N_HIDDEN * POOLING), out_big.shape
    np.testing.assert_allclose(np.asarray(out_big), ref_big, rtol=1e-4, atol=1e-4)

    print("KERNEL_OK")
</pallas_src>

<mosaic_0001>
module attributes {stable_mosaic.version = 11 : i64} {
  func.func @_tae_decoder_kernel(%arg0: i32, %arg1: memref<8x256xf32, #tpu.memory_space<vmem>>, %arg2: memref<256x512xf32, #tpu.memory_space<vmem>>, %arg3: memref<1x512xf32, #tpu.memory_space<vmem>>, %arg4: memref<8x512xf32, #tpu.memory_space<vmem>>) attributes {dimension_semantics = [#tpu.dimension_semantics<parallel>], iteration_bounds = array<i64: 1>, scalar_prefetch = 0 : i64, scratch_operands = 0 : i64, tpu.core_type = #tpu.core_type<tc>, window_params = [{transform_indices = @transform_0, window_bounds = array<i64: 8, 256>}, {pipeline_mode = #tpu.pipeline_mode<synchronous>, transform_indices = @transform_1, window_bounds = array<i64: 256, 512>}, {pipeline_mode = #tpu.pipeline_mode<synchronous>, transform_indices = @transform_2, window_bounds = array<i64: 1, 512>}, {transform_indices = @transform_3, window_bounds = array<i64: 8, 512>}]} {
    %c0 = arith.constant 0 : index
    %c0_0 = arith.constant 0 : index
    %0 = vector.load %arg1[%c0, %c0_0] : memref<8x256xf32, #tpu.memory_space<vmem>>, vector<8x256xf32>
    %c0_1 = arith.constant 0 : index
    %c0_2 = arith.constant 0 : index
    %1 = vector.load %arg2[%c0_1, %c0_2] : memref<256x512xf32, #tpu.memory_space<vmem>>, vector<256x512xf32>
    %cst = arith.constant dense<0.000000e+00> : vector<8x512xf32>
    %2 = tpu.matmul %0, %1, %cst {dimension_numbers = #tpu.dot_dimension_numbers<[1], [0], [0], [1], [0, 0, 1, 1], [], []>} : vector<8x256xf32>, vector<256x512xf32>, vector<8x512xf32> -> vector<8x512xf32>
    %c0_3 = arith.constant 0 : index
    %c0_4 = arith.constant 0 : index
    %3 = vector.load %arg3[%c0_3, %c0_4] : memref<1x512xf32, #tpu.memory_space<vmem>>, vector<1x512xf32>
    %4 = vector.broadcast %3 : vector<1x512xf32> to vector<8x512xf32>
    %5 = arith.addf %2, %4 : vector<8x512xf32>
    %c0_5 = arith.constant 0 : index
    %c0_6 = arith.constant 0 : index
    %6 = vector.load %arg4[%c0_5, %c0_6] : memref<8x512xf32, #tpu.memory_space<vmem>>, vector<8x512xf32>
    tpu.vector_store %arg4[%c0_5, %c0_6], %5 {strides = array<i32>} : memref<8x512xf32, #tpu.memory_space<vmem>>, vector<8x512xf32>,
    return
  }
  func.func @transform_0(%arg0: i32) -> (i32, i32) {
    %c0_i32 = arith.constant 0 : i32
    %c0_i32_0 = arith.constant 0 : i32
    return %arg0, %c0_i32 : i32, i32
  }
  func.func @transform_1(%arg0: i32) -> (i32, i32) {
    %c0_i32 = arith.constant 0 : i32
    %c0_i32_0 = arith.constant 0 : i32
    %c0_i32_1 = arith.constant 0 : i32
    return %c0_i32, %c0_i32_0 : i32, i32
  }
  func.func @transform_2(%arg0: i32) -> (i32, i32) {
    %c0_i32 = arith.constant 0 : i32
    %c0_i32_0 = arith.constant 0 : i32
    %c0_i32_1 = arith.constant 0 : i32
    return %c0_i32, %c0_i32_0 : i32, i32
  }
  func.func @transform_3(%arg0: i32) -> (i32, i32) {
    %c0_i32 = arith.constant 0 : i32
    %c0_i32_0 = arith.constant 0 : i32
    return %arg0, %c0_i32 : i32, i32
  }
}

</mosaic_0001>

<llo_original>
// kernel: tae_decoder_forward.1
$region0: #{tae_decoder_forward.1}
  #allocation0 [shape = 'u32[]', space=smem, size = 0x4, offset = 0x4, fixed_abs, tag = 'smem constant byte address 0x4 - core index']
  #allocation1 [shape = 'u32[144,128]{1,0:T(1,128)}', space=vmem, size = 0x12000, scoped, tag = 'internal scratch']
  %s0 = inlined_call_operand.vmem [shape: f32[8,256], index: 0, kind: input, shape index: {}]
  %s1 = inlined_call_operand.hbm [shape: f32[256,512], index: 1, kind: input, shape index: {}]
  %s2 = inlined_call_operand.vmem [shape: f32[1,512], index: 2, kind: input, shape index: {}]
  %s3 = inlined_call_operand.vmem [shape: f32[8,512], index: 3, kind: output, shape index: {}]
  %s4 = sld [smem:[#allocation0]]
  $region26: #{tae_decoder_forward.1} parent=0
    _
  %s6 = ssub.s32 1, %s4
  %s7 = scalar_select 0, %s6, %s4
  $region1: #{tae_decoder_forward.1} parent=0
    #allocation2 [shape = 'u8[524288]{0}', space=vmem, size = 0x80000, scoped, tag = 'input window, operand 1, single buffered']
    #allocation3 [shape = 's32[1]{0}', space=sflag, size = 0x4, scoped, tag = 'scoped memory for tae_decoder_forward.1']
    %8 = vsyncpa [#allocation3], 0
    // Predicated region
    $region2: #{tae_decoder_forward.1} parent=1 // pred_check
      _
    $region3: #{tae_decoder_forward.1} parent=1 // pred_check_branch
      %10 = sbr.rel (0) target = $region5
    $region4: #{tae_decoder_forward.1} parent=1 // pred_region
      _
    $region5: #{tae_decoder_forward.1} parent=1 // pred_fallthru
      _
    // Predicated region
    $region6: #{tae_decoder_forward.1} parent=1 // pred_check
      _
    $region7: #{tae_decoder_forward.1} parent=1 // pred_check_branch
      %12 = sbr.rel (0) target = $region9
    $region8: #{tae_decoder_forward.1} parent=1 // pred_region
      %s14 = ssub.s32 16384, 16384
      %15 = vsyncadd [#allocation3], %s14
      %s16 = sshll.u32 [#allocation2], 4
      %s17 = int_to_ptr.vmem [resolvable:$true] %s16
      %22 = dma.hbm_to_vmem [thread:$0]  %s1, 16384, %s17, [#allocation3], 512, 512, 32
    $region9: #{tae_decoder_forward.1} parent=1 // pred_fallthru
      _
    // Predicated region
    $region10: #{tae_decoder_forward.1} parent=1 // pred_check
      _
    $region11: #{tae_decoder_forward.1} parent=1 // pred_check_branch
      %24 = sbr.rel (0) target = $region13
    $region12: #{tae_decoder_forward.1} parent=1 // pred_region
      _
    $region13: #{tae_decoder_forward.1} parent=1 // pred_fallthru
      _
    // Predicated region
    $region14: #{tae_decoder_forward.1} parent=1 // pred_check
      _
    $region15: #{tae_decoder_forward.1} parent=1 // pred_check_branch
      %26 = sbr.rel (0) target = $region17
    $region16: #{tae_decoder_forward.1} parent=1 // pred_region
      %27 = dma.done [#allocation3], 16384
    $region17: #{tae_decoder_forward.1} parent=1 // pred_fallthru
      _
    %v28 = vld [vmem:[%s0] sm:$0xff]
    %v29 = vld [vmem:[%s0 + $0x8] sm:$0xff]
    %v30 = vld [vmem:[#allocation2] sm:$0xff]
    %v31 = vld [vmem:[#allocation2 + $0x8] sm:$0xff]
    %v32 = vld [vmem:[#allocation2 + $0x10] sm:$0xff]
    %v33 = vld [vmem:[#allocation2 + $0x18] sm:$0xff]
    %v34 = vld [vmem:[#allocation2 + $0x20] sm:$0xff]
    %v35 = vld [vmem:[#allocation2 + $0x28] sm:$0xff]
    %v36 = vld [vmem:[#allocation2 + $0x30] sm:$0xff]
    %v37 = vld [vmem:[#allocation2 + $0x38] sm:$0xff]
    %v38 = vld [vmem:[#allocation2 + $0x40] sm:$0xff]
    %v39 = vld [vmem:[#allocation2 + $0x48] sm:$0xff]
    %v40 = vld [vmem:[#allocation2 + $0x50] sm:$0xff]
    %v41 = vld [vmem:[#allocation2 + $0x58] sm:$0xff]
    %v42 = vld [vmem:[#allocation2 + $0x60] sm:$0xff]
    %v43 = vld [vmem:[#allocation2 + $0x68] sm:$0xff]
    %v44 = vld [vmem:[#allocation2 + $0x70] sm:$0xff]
    %v45 = vld [vmem:[#allocation2 + $0x78] sm:$0xff]
    %v46 = vld [vmem:[#allocation2 + $0x80] sm:$0xff]
    %v47 = vld [vmem:[#allocation2 + $0x88] sm:$0xff]
    %v48 = vld [vmem:[#allocation2 + $0x90] sm:$0xff]
    %v49 = vld [vmem:[#allocation2 + $0x98] sm:$0xff]
    %v50 = vld [vmem:[#allocation2 + $0xa0] sm:$0xff]
    %v51 = vld [vmem:[#allocation2 + $0xa8] sm:$0xff]
    %v52 = vld [vmem:[#allocation2 + $0xb0] sm:$0xff]
    %v53 = vld [vmem:[#allocation2 + $0xb8] sm:$0xff]
    %v54 = vld [vmem:[#allocation2 + $0xc0] sm:$0xff]
    %v55 = vld [vmem:[#allocation2 + $0xc8] sm:$0xff]
    %v56 = vld [vmem:[#allocation2 + $0xd0] sm:$0xff]
    %v57 = vld [vmem:[#allocation2 + $0xd8] sm:$0xff]
    %v58 = vld [vmem:[#allocation2 + $0xe0] sm:$0xff]
    %v59 = vld [vmem:[#allocation2 + $0xe8] sm:$0xff]
    %v60 = vld [vmem:[#allocation2 + $0xf0] sm:$0xff]
    %v61 = vld [vmem:[#allocation2 + $0xf8] sm:$0xff]
    %v62 = vld [vmem:[#allocation2 + $0x100] sm:$0xff]
    %v63 = vld [vmem:[#allocation2 + $0x108] sm:$0xff]
    %v64 = vld [vmem:[#allocation2 + $0x110] sm:$0xff]
    %v65 = vld [vmem:[#allocation2 + $0x118] sm:$0xff]
    %v66 = vld [vmem:[#allocation2 + $0x120] sm:$0xff]
    %v67 = vld [vmem:[#allocation2 + $0x128] sm:$0xff]
    %v68 = vld [vmem:[#allocation2 + $0x130] sm:$0xff]
    %v69 = vld [vmem:[#allocation2 + $0x138] sm:$0xff]
    %v70 = vld [vmem:[#allocation2 + $0x140] sm:$0xff]
    %v71 = vld [vmem:[#allocation2 + $0x148] sm:$0xff]
    %v72 = vld [vmem:[#allocation2 + $0x150] sm:$0xff]
    %v73 = vld [vmem:[#allocation2 + $0x158] sm:$0xff]
    %v74 = vld [vmem:[#allocation2 + $0x160] sm:$0xff]
    %v75 = vld [vmem:[#allocation2 + $0x168] sm:$0xff]
    %v76 = vld [vmem:[#allocation2 + $0x170] sm:$0xff]
    %v77 = vld [vmem:[#allocation2 + $0x178] sm:$0xff]
    %v78 = vld [vmem:[#allocation2 + $0x180] sm:$0xff]
    %v79 = vld [vmem:[#allocation2 + $0x188] sm:$0xff]
    %v80 = vld [vmem:[#allocation2 + $0x190] sm:$0xff]
    %v81 = vld [vmem:[#allocation2 + $0x198] sm:$0xff]
    %v82 = vld [vmem:[#allocation2 + $0x1a0] sm:$0xff]
    %v83 = vld [vmem:[#allocation2 + $0x1a8] sm:$0xff]
    %v84 = vld [vmem:[#allocation2 + $0x1b0] sm:$0xff]
    %v85 = vld [vmem:[#allocation2 + $0x1b8] sm:$0xff]
    %v86 = vld [vmem:[#allocation2 + $0x1c0] sm:$0xff]
    %v87 = vld [vmem:[#allocation2 + $0x1c8] sm:$0xff]
    %v88 = vld [vmem:[#allocation2 + $0x1d0] sm:$0xff]
    %v89 = vld [vmem:[#allocation2 + $0x1d8] sm:$0xff]
    %v90 = vld [vmem:[#allocation2 + $0x1e0] sm:$0xff]
    %v91 = vld [vmem:[#allocation2 + $0x1e8] sm:$0xff]
    %v92 = vld [vmem:[#allocation2 + $0x1f0] sm:$0xff]
    %v93 = vld [vmem:[#allocation2 + $0x1f8] sm:$0xff]
    %v94 = vld [vmem:[#allocation2 + $0x200] sm:$0xff]
    %v95 = vld [vmem:[#allocation2 + $0x208] sm:$0xff]
    %v96 = vld [vmem:[#allocation2 + $0x210] sm:$0xff]
    %v97 = vld [vmem:[#allocation2 + $0x218] sm:$0xff]
    %v98 = vld [vmem:[#allocation2 + $0x220] sm:$0xff]
    %v99 = vld [vmem:[#allocation2 + $0x228] sm:$0xff]
    %v100 = vld [vmem:[#allocation2 + $0x230] sm:$0xff]
    %v101 = vld [vmem:[#allocation2 + $0x238] sm:$0xff]
    %v102 = vld [vmem:[#allocation2 + $0x240] sm:$0xff]
    %v103 = vld [vmem:[#allocation2 + $0x248] sm:$0xff]
    %v104 = vld [vmem:[#allocation2 + $0x250] sm:$0xff]
    %v105 = vld [vmem:[#allocation2 + $0x258] sm:$0xff]
    %v106 = vld [vmem:[#allocation2 + $0x260] sm:$0xff]
    %v107 = vld [vmem:[#allocation2 + $0x268] sm:$0xff]
    %v108 = vld [vmem:[#allocation2 + $0x270] sm:$0xff]
    %v109 = vld [vmem:[#allocation2 + $0x278] sm:$0xff]
    %v110 = vld [vmem:[#allocation2 + $0x280] sm:$0xff]
    %v111 = vld [vmem:[#allocation2 + $0x288] sm:$0xff]
    %v112 = vld [vmem:[#allocation2 + $0x290] sm:$0xff]
    %v113 = vld [vmem:[#allocation2 + $0x298] sm:$0xff]
    %v114 = vld [vmem:[#allocation2 + $0x2a0] sm:$0xff]
    %v115 = vld [vmem:[#allocation2 + $0x2a8] sm:$0xff]
    %v116 = vld [vmem:[#allocation2 + $0x2b0] sm:$0xff]
    %v117 = vld [vmem:[#allocation2 + $0x2b8] sm:$0xff]
    %v118 = vld [vmem:[#allocation2 + $0x2c0] sm:$0xff]
    %v119 = vld [vmem:[#allocation2 + $0x2c8] sm:$0xff]
    %v120 = vld [vmem:[#allocation2 + $0x2d0] sm:$0xff]
    %v121 = vld [vmem:[#allocation2 + $0x2d8] sm:$0xff]
    %v122 = vld [vmem:[#allocation2 + $0x2e0] sm:$0xff]
    %v123 = vld [vmem:[#allocation2 + $0x2e8] sm:$0xff]
    %v124 = vld [vmem:[#allocation2 + $0x2f0] sm:$0xff]
    %v125 = vld [vmem:[#allocation2 + $0x2f8] sm:$0xff]
    %v126 = vld [vmem:[#allocation2 + $0x300] sm:$0xff]
    %v127 = vld [vmem:[#allocation2 + $0x308] sm:$0xff]
    %v128 = vld [vmem:[#allocation2 + $0x310] sm:$0xff]
    %v129 = vld [vmem:[#allocation2 + $0x318] sm:$0xff]
    %v130 = vld [vmem:[#allocation2 + $0x320] sm:$0xff]
    %v131 = vld [vmem:[#allocation2 + $0x328] sm:$0xff]
    %v132 = vld [vmem:[#allocation2 + $0x330] sm:$0xff]
    %v133 = vld [vmem:[#allocation2 + $0x338] sm:$0xff]
    %v134 = vld [vmem:[#allocation2 + $0x340] sm:$0xff]
    %v135 = vld [vmem:[#allocation2 + $0x348] sm:$0xff]
    %v136 = vld [vmem:[#allocation2 + $0x350] sm:$0xff]
    %v137 = vld [vmem:[#allocation2 + $0x358] sm:$0xff]
    %v138 = vld [vmem:[#allocation2 + $0x360] sm:$0xff]
    %v139 = vld [vmem:[#allocation2 + $0x368] sm:$0xff]
    %v140 = vld [vmem:[#allocation2 + $0x370] sm:$0xff]
    %v141 = vld [vmem:[#allocation2 + $0x378] sm:$0xff]
    %v142 = vld [vmem:[#allocation2 + $0x380] sm:$0xff]
    %v143 = vld [vmem:[#allocation2 + $0x388] sm:$0xff]
    %v144 = vld [vmem:[#allocation2 + $0x390] sm:$0xff]
    %v145 = vld [vmem:[#allocation2 + $0x398] sm:$0xff]
    %v146 = vld [vmem:[#allocation2 + $0x3a0] sm:$0xff]
    %v147 = vld [vmem:[#allocation2 + $0x3a8] sm:$0xff]
    %v148 = vld [vmem:[#allocation2 + $0x3b0] sm:$0xff]
    %v149 = vld [vmem:[#allocation2 + $0x3b8] sm:$0xff]
    %v150 = vld [vmem:[#allocation2 + $0x3c0] sm:$0xff]
    %v151 = vld [vmem:[#allocation2 + $0x3c8] sm:$0xff]
    %v152 = vld [vmem:[#allocation2 + $0x3d0] sm:$0xff]
    %v153 = vld [vmem:[#allocation2 + $0x3d8] sm:$0xff]
    %v154 = vld [vmem:[#allocation2 + $0x3e0] sm:$0xff]
    %v155 = vld [vmem:[#allocation2 + $0x3e8] sm:$0xff]
    %v156 = vld [vmem:[#allocation2 + $0x3f0] sm:$0xff]
    %v157 = vld [vmem:[#allocation2 + $0x3f8] sm:$0xff]
    %v158 = vld [vmem:[%s2] sm:$0xf]
    %v160 = vlaneseq
    %v161 = vshrl.u32 %v160, 7
    %v162 = vsub.s32 0, %v161
    %v163 = vrot.slane %v158, %v162
    %v164 = vlaneseq
    %v165 = vshrl.u32 %v164, 7
    %v166 = vsub.s32 1, %v165
    %v167 = vrot.slane %v158, %v166
    %v168 = vlaneseq
    %v169 = vshrl.u32 %v168, 7
    %v170 = vsub.s32 2, %v169
    %v171 = vrot.slane %v158, %v170
    %v172 = vlaneseq
    %v173 = vshrl.u32 %v172, 7
    %v174 = vsub.s32 3, %v173
    %v175 = vrot.slane %v158, %v174
    %180 = vmatprep.subr.mxu0 %v31
    %181 = vmatpush1.msra.mxu0 %v30
    %182 = vmatprep.subr.mxu0 %v35
    %183 = vmatpush1.msra.mxu0 %v34
    %184 = vmatprep.subr.mxu0 %v39
    %185 = vmatpush1.msra.mxu0 %v38
    %186 = vmatprep.subr.mxu0 %v43
    %187 = vmatpush1.msra.mxu0 %v42
    %188 = vmatprep.subr.mxu0 %v47
    %189 = vmatpush1.msra.mxu0 %v46
    %190 = vmatprep.subr.mxu0 %v51
    %191 = vmatpush1.msra.mxu0 %v50
    %192 = vmatprep.subr.mxu0 %v55
    %193 = vmatpush1.msra.mxu0 %v54
    %194 = vmatprep.subr.mxu0 %v59
    %195 = vmatpush1.msra.mxu0 %v58
    %196 = vmatprep.subr.mxu0 %v63
    %197 = vmatpush1.msra.mxu0 %v62
    %198 = vmatprep.subr.mxu0 %v67
    %199 = vmatpush1.msra.mxu0 %v66
    %200 = vmatprep.subr.mxu0 %v71
    %201 = vmatpush1.msra.mxu0 %v70
    %202 = vmatprep.subr.mxu0 %v75
    %203 = vmatpush1.msra.mxu0 %v74
    %204 = vmatprep.subr.mxu0 %v79
    %205 = vmatpush1.msra.mxu0 %v78
    %206 = vmatprep.subr.mxu0 %v83
    %207 = vmatpush1.msra.mxu0 %v82
    %208 = vmatprep.subr.mxu0 %v87
    %209 = vmatpush1.msra.mxu0 %v86
    %210 = vmatprep.subr.mxu0 %v91
    %211 = vmatpush1.msra.mxu0 %v90
    %212 = vmatprep.subr.mxu0 %v95
    %213 = vmatpush1.msra.mxu0 %v94
    %214 = vmatprep.subr.mxu0 %v99
    %215 = vmatpush1.msra.mxu0 %v98
    %216 = vmatprep.subr.mxu0 %v103
    %217 = vmatpush1.msra.mxu0 %v102
    %218 = vmatprep.subr.mxu0 %v107
    %219 = vmatpush1.msra.mxu0 %v106
    %220 = vmatprep.subr.mxu0 %v111
    %221 = vmatpush1.msra.mxu0 %v110
    %222 = vmatprep.subr.mxu0 %v115
    %223 = vmatpush1.msra.mxu0 %v114
    %224 = vmatprep.subr.mxu0 %v119
    %225 = vmatpush1.msra.mxu0 %v118
    %226 = vmatprep.subr.mxu0 %v123
    %227 = vmatpush1.msra.mxu0 %v122
    %228 = vmatprep.subr.mxu0 %v127
    %229 = vmatpush1.msra.mxu0 %v126
    %230 = vmatprep.subr.mxu0 %v131
    %231 = vmatpush1.msra.mxu0 %v130
    %232 = vmatprep.subr.mxu0 %v135
    %233 = vmatpush1.msra.mxu0 %v134
    %234 = vmatprep.subr.mxu0 %v139
    %235 = vmatpush1.msra.mxu0 %v138
    %236 = vmatprep.subr.mxu0 %v143
    %237 = vmatpush1.msra.mxu0 %v142
    %238 = vmatprep.subr.mxu0 %v147
    %239 = vmatpush1.msra.mxu0 %v146
    %240 = vmatprep.subr.mxu0 %v151
    %241 = vmatpush1.msra.mxu0 %v150
    %242 = vmatprep.subr.mxu0 %v155
    %243 = vmatpush1.msra.mxu0 %v154
    %244 = vmatprep.mubr.f32.mxu0 %v29
    %245 = vmatmul.mubr.f32.gmra.mrb[0].mxu0 %v28
    %v246 = vpop.f32.mrb[0].mxu0
    %v247 = vadd.f32 %v163, %v246
    %v248 = vpop.f32.mrb[0].mxu0
    %v249 = vadd.f32 %v167, %v248
    %250 = vdwg.mxu0
    %251 = vmatprep.subr.mxu0 %v33
    %252 = vmatpush1.msra.mxu0 %v32
    %253 = vmatprep.subr.mxu0 %v37
    %254 = vmatpush1.msra.mxu0 %v36
    %255 = vmatprep.subr.mxu0 %v41
    %256 = vmatpush1.msra.mxu0 %v40
    %257 = vmatprep.subr.mxu0 %v45
    %258 = vmatpush1.msra.mxu0 %v44
    %259 = vmatprep.subr.mxu0 %v49
    %260 = vmatpush1.msra.mxu0 %v48
    %261 = vmatprep.subr.mxu0 %v53
    %262 = vmatpush1.msra.mxu0 %v52
    %263 = vmatprep.subr.mxu0 %v57
    %264 = vmatpush1.msra.mxu0 %v56
    %265 = vmatprep.subr.mxu0 %v61
    %266 = vmatpush1.msra.mxu0 %v60
    %267 = vmatprep.subr.mxu0 %v65
    %268 = vmatpush1.msra.mxu0 %v64
    %269 = vmatprep.subr.mxu0 %v69
    %270 = vmatpush1.msra.mxu0 %v68
    %271 = vmatprep.subr.mxu0 %v73
    %272 = vmatpush1.msra.mxu0 %v72
    %273 = vmatprep.subr.mxu0 %v77
    %274 = vmatpush1.msra.mxu0 %v76
    %275 = vmatprep.subr.mxu0 %v81
    %276 = vmatpush1.msra.mxu0 %v80
    %277 = vmatprep.subr.mxu0 %v85
    %278 = vmatpush1.msra.mxu0 %v84
    %279 = vmatprep.subr.mxu0 %v89
    %280 = vmatpush1.msra.mxu0 %v88
    %281 = vmatprep.subr.mxu0 %v93
    %282 = vmatpush1.msra.mxu0 %v92
    %283 = vmatprep.subr.mxu0 %v97
    %284 = vmatpush1.msra.mxu0 %v96
    %285 = vmatprep.subr.mxu0 %v101
    %286 = vmatpush1.msra.mxu0 %v100
    %287 = vmatprep.subr.mxu0 %v105
    %288 = vmatpush1.msra.mxu0 %v104
    %289 = vmatprep.subr.mxu0 %v109
    %290 = vmatpush1.msra.mxu0 %v108
    %291 = vmatprep.subr.mxu0 %v113
    %292 = vmatpush1.msra.mxu0 %v112
    %293 = vmatprep.subr.mxu0 %v117
    %294 = vmatpush1.msra.mxu0 %v116
    %295 = vmatprep.subr.mxu0 %v121
    %296 = vmatpush1.msra.mxu0 %v120
    %297 = vmatprep.subr.mxu0 %v125
    %298 = vmatpush1.msra.mxu0 %v124
    %299 = vmatprep.subr.mxu0 %v129
    %300 = vmatpush1.msra.mxu0 %v128
    %301 = vmatprep.subr.mxu0 %v133
    %302 = vmatpush1.msra.mxu0 %v132
    %303 = vmatprep.subr.mxu0 %v137
    %304 = vmatpush1.msra.mxu0 %v136
    %305 = vmatprep.subr.mxu0 %v141
    %306 = vmatpush1.msra.mxu0 %v140
    %307 = vmatprep.subr.mxu0 %v145
    %308 = vmatpush1.msra.mxu0 %v144
    %309 = vmatprep.subr.mxu0 %v149
    %310 = vmatpush1.msra.mxu0 %v148
    %311 = vmatprep.subr.mxu0 %v153
    %312 = vmatpush1.msra.mxu0 %v152
    %313 = vmatprep.subr.mxu0 %v157
    %314 = vmatpush1.msra.mxu0 %v156
    %315 = vmatprep.mubr.f32.mxu0 %v29
    %316 = vmatmul.mubr.f32.gmra.mrb[0].mxu0 %v28
    %v317 = vpop.f32.mrb[0].mxu0
    %v318 = vadd.f32 %v171, %v317
    %v319 = vpop.f32.mrb[0].mxu0
    %v320 = vadd.f32 %v175, %v319
    %321 = vdwg.mxu0
    %322 = vst [vmem:[%s3] sm:$0xff] %v247
    %323 = vst [vmem:[%s3 + $0x8] sm:$0xff] %v249
    %324 = vst [vmem:[%s3 + $0x10] sm:$0xff] %v318
    %325 = vst [vmem:[%s3 + $0x18] sm:$0xff] %v320
    // Predicated region
    $region18: #{tae_decoder_forward.1} parent=1 // pred_check
      _
    $region19: #{tae_decoder_forward.1} parent=1 // pred_check_branch
      %327 = sbr.rel (0) target = $region21
    $region20: #{tae_decoder_forward.1} parent=1 // pred_region
      _
    $region21: #{tae_decoder_forward.1} parent=1 // pred_fallthru
      _
    // Predicated region
    $region22: #{tae_decoder_forward.1} parent=1 // pred_check
      _
    $region23: #{tae_decoder_forward.1} parent=1 // pred_check_branch
      %329 = sbr.rel (0) target = $region25
    $region24: #{tae_decoder_forward.1} parent=1 // pred_region
      _
    $region25: #{tae_decoder_forward.1} parent=1 // pred_fallthru
      _
    %330 = vsyncpa [#allocation3], 1

</llo_original>
